<compile_context>
chip_gen: v5e
topology: v5e:2x2
jax: 0.10.0
libtpu: 0.0.40
codegen_flags: <defaults>
</compile_context>

<pallas_src>
import functools
from typing import NamedTuple

import jax
import jax.numpy as jnp
from jax.experimental import pallas as pl
from jax.experimental.pallas import tpu as pltpu


def _round_up(v, m):
    return (v + m - 1) // m * m


def _cdiv(a, b):
    return (a + b - 1) // b


# --------------------------------------------------------------------------- #
# Kernel
# --------------------------------------------------------------------------- #
def _onenet_kernel(x_ref, wf_ref, bf_ref, o_ref):
    """One (TM, TN) output tile: two MXU matmuls + fused ELU-combine epilogue."""
    x = x_ref[...]                                                      # (TM, D)
    y1 = jnp.dot(x, wf_ref[0], preferred_element_type=jnp.float32) + bf_ref[0]
    y2 = jnp.dot(x, wf_ref[1], preferred_element_type=jnp.float32) + bf_ref[1]
    # elu(a)+elu(b)+elu(a)*elu(b) == (1+elu(a))*(1+elu(b)) - 1, alpha = 1.
    # Zero-padded hidden columns give y==0 -> g==1 -> out==0 (harmless, sliced off).
    g1 = jnp.where(y1 > 0, y1 + 1.0, jnp.exp(y1))
    g2 = jnp.where(y2 > 0, y2 + 1.0, jnp.exp(y2))
    o_ref[...] = (g1 * g2 - 1.0).astype(o_ref.dtype)


# --------------------------------------------------------------------------- #
# One-time parameter packing (do NOT call per forward)
# --------------------------------------------------------------------------- #
class OneNetPacked(NamedTuple):
    wf: jax.Array  # (2, D, Hp) stacked, lane-padded fc1/fc2 weights
    bf: jax.Array  # (2, 1, Hp) stacked, lane-padded fc1/fc2 biases (f32)


def pack_onenet_params(w1, b1, w2, b2, *, param_dtype=jnp.float32):
    """Pack fc1/fc2 into the kernel layout. Call once at init time and reuse."""
    D, H = w1.shape
    Hp = _round_up(H, 128)                       # lane-dense hidden dim
    wf = jnp.zeros((2, D, Hp), dtype=param_dtype)
    wf = wf.at[0, :, :H].set(w1.astype(param_dtype))
    wf = wf.at[1, :, :H].set(w2.astype(param_dtype))
    bf = jnp.zeros((2, 1, Hp), dtype=jnp.float32)  # bias stays f32 (added post-MXU)
    bf = bf.at[0, 0, :H].set(b1.astype(jnp.float32))
    bf = bf.at[1, 0, :H].set(b2.astype(jnp.float32))
    return OneNetPacked(wf, bf)


# --------------------------------------------------------------------------- #
# Tiling heuristics
# --------------------------------------------------------------------------- #
def _choose_tm(batch, tm_max):
    tm_max = max(8, (int(tm_max) // 8) * 8)      # keep (8,128) sublane rule
    n_tiles = _cdiv(batch, tm_max)
    if batch >= 16 and n_tiles < 2:
        n_tiles = 2                              # >=2 tiles so both v7x TCs get work
    return _round_up(_cdiv(batch, n_tiles), 8)   # minimal padding waste (<= 7 rows)


def _choose_tn(hp, d, itemsize, tn_max, weight_tile_budget=24 * 1024 * 1024):
    # Cap TN so one stacked weight tile (2, D, TN) fits a VMEM budget (v7x: 64 MiB/TC).
    cap = max(128, weight_tile_budget // (2 * d * itemsize))
    tn_max = max(128, (min(int(tn_max), cap) // 128) * 128)
    cand = min(hp, tn_max)
    while cand > 128:
        if hp % cand == 0:
            return cand
        cand -= 128
    return 128


# --------------------------------------------------------------------------- #
# Forward
# --------------------------------------------------------------------------- #
def onenet_forward(x, packed, *, hidden_dim, tm_max=512, tn_max=4096,
                   out_dtype=jnp.float32):
    """x: (B, D) -> (B, hidden_dim). `packed` is the result of pack_onenet_params."""
    wf, bf = packed.wf, packed.bf
    B, D = x.shape
    Hp = wf.shape[2]
    H = int(hidden_dim)
    itemsize = wf.dtype.itemsize

    TM = _choose_tm(B, tm_max)
    TN = _choose_tn(Hp, D, itemsize, tn_max)
    Bp = _round_up(B, TM)
    nn, nb = Hp // TN, Bp // TM

    xp = x.astype(wf.dtype)                      # bf16 path if params packed in bf16
    if Bp != B:
        xp = jnp.pad(xp, ((0, Bp - B), (0, 0)))  # zero rows are sliced off below

    # Grid-invariant weight/bias (single N tile) -> single-buffer to halve their
    # VMEM footprint; with N tiling keep default double-buffering so the next
    # weight tile's DMA overlaps compute.
    w_mode = pl.Buffered(1) if nn == 1 else None
    in_specs = [
        pl.BlockSpec((TM, D), lambda n, i: (i, 0)),                      # streamed x
        pl.BlockSpec((2, D, TN), lambda n, i: (0, 0, n), pipeline_mode=w_mode),
        pl.BlockSpec((2, 1, TN), lambda n, i: (0, 0, n), pipeline_mode=w_mode),
    ]

    w_bufs = 1 if nn == 1 else 2
    vmem_bytes = (
        2 * TM * D * itemsize                    # x (double-buffered)
        + w_bufs * 2 * D * TN * itemsize         # stacked weight tile(s)
        + w_bufs * 2 * 1 * TN * 4                # stacked bias tile(s)
        + 2 * TM * TN * 4                        # out (double-buffered, f32)
        + 2 * TM * TN * 4                        # y/g intermediates headroom
    )
    vmem_limit = int(min(max(vmem_bytes * 2, 32 * 1024 * 1024), 64 * 1024 * 1024))

    flops = 2 * Bp * D * (2 * Hp) + 8 * Bp * Hp
    transcendentals = 2 * Bp * Hp
    bytes_accessed = (nn * Bp * D + 2 * D * Hp) * itemsize + 2 * Hp * 4 + Bp * Hp * 4

    out_padded = pl.pallas_call(
        _onenet_kernel,
        out_shape=jax.ShapeDtypeStruct((Bp, Hp), out_dtype),
        grid_spec=pl.GridSpec(
            grid=(nn, nb),                       # N outer (weight streamed once)
            in_specs=in_specs,
            out_specs=pl.BlockSpec((TM, TN), lambda n, i: (i, n)),
        ),
        compiler_params=pltpu.CompilerParams(
            dimension_semantics=("parallel", "parallel"),
            vmem_limit_bytes=vmem_limit,
        ),
        cost_estimate=pl.CostEstimate(
            flops=flops,
            transcendentals=transcendentals,
            bytes_accessed=bytes_accessed,
        ),
    )(xp, wf, bf)

    # No-op when Bp==B and Hp==H; otherwise one extra output-sized copy.  Consumers
    # that tolerate padding can take the padded buffer directly.
    return out_padded[:B, :H]


# --------------------------------------------------------------------------- #
# Reference + self-test
# --------------------------------------------------------------------------- #
def _reference(x, w1, b1, w2, b2):
    y1 = x @ w1 + b1
    y2 = x @ w2 + b2
    tx1 = jnp.where(y1 > 0, y1, jnp.expm1(y1))
    tx2 = jnp.where(y2 > 0, y2, jnp.expm1(y2))
    return tx1 + tx2 + tx1 * tx2


if __name__ == "__main__":
    key = jax.random.PRNGKey(0)
    B, D, H = 8, 16, 32  # batch, input_dim, hidden_dim

    k_x, k_w1, k_b1, k_w2, k_b2 = jax.random.split(key, 5)
    x = jax.random.normal(k_x, (B, D), dtype=jnp.float32)

    # Deterministic parameter init (mimics PyTorch uniform(-1/sqrt(D), 1/sqrt(D))).
    bound = 1.0 / jnp.sqrt(jnp.float32(D))
    w1 = jax.random.uniform(k_w1, (D, H), minval=-bound, maxval=bound, dtype=jnp.float32)
    b1 = jax.random.uniform(k_b1, (H,), minval=-bound, maxval=bound, dtype=jnp.float32)
    w2 = jax.random.uniform(k_w2, (D, H), minval=-bound, maxval=bound, dtype=jnp.float32)
    b2 = jax.random.uniform(k_b2, (H,), minval=-bound, maxval=bound, dtype=jnp.float32)

    # Pack ONCE at init time (review item 1); per-call forward only touches x.
    packed = pack_onenet_params(w1, b1, w2, b2)
    packed = OneNetPacked(*(jax.block_until_ready(a) for a in packed))

    fwd = jax.jit(functools.partial(onenet_forward, hidden_dim=H))
    out = jax.block_until_ready(fwd(x, packed))

    ref = _reference(x, w1, b1, w2, b2)
    assert out.shape == (B, H), f"bad output shape {out.shape}"
    assert jnp.allclose(out, ref, atol=1e-5, rtol=1e-5), "mismatch vs reference"

    print("KERNEL_OK")
</pallas_src>

<mosaic_0001>
module attributes {stable_mosaic.version = 11 : i64} {
  func.func @_onenet_kernel(%arg0: i32, %arg1: i32, %arg2: memref<8x16xf32, #tpu.memory_space<vmem>>, %arg3: memref<2x16x128xf32, #tpu.memory_space<vmem>>, %arg4: memref<2x1x128xf32, #tpu.memory_space<vmem>>, %arg5: memref<8x128xf32, #tpu.memory_space<vmem>>) attributes {dimension_semantics = [#tpu.dimension_semantics<parallel>, #tpu.dimension_semantics<parallel>], iteration_bounds = array<i64: 1, 1>, scalar_prefetch = 0 : i64, scratch_operands = 0 : i64, tpu.core_type = #tpu.core_type<tc>, window_params = [{transform_indices = @transform_0, window_bounds = array<i64: 8, 16>}, {pipeline_mode = #tpu.pipeline_mode<synchronous>, transform_indices = @transform_1, window_bounds = array<i64: 2, 16, 128>}, {pipeline_mode = #tpu.pipeline_mode<synchronous>, transform_indices = @transform_2, window_bounds = array<i64: 2, 1, 128>}, {transform_indices = @transform_3, window_bounds = array<i64: 8, 128>}]} {
    %c0 = arith.constant 0 : index
    %c0_0 = arith.constant 0 : index
    %0 = vector.load %arg2[%c0, %c0_0] : memref<8x16xf32, #tpu.memory_space<vmem>>, vector<8x16xf32>
    %c0_1 = arith.constant 0 : index
    %c0_2 = arith.constant 0 : index
    %c0_3 = arith.constant 0 : index
    %1 = vector.load %arg3[%c0_1, %c0_2, %c0_3] : memref<2x16x128xf32, #tpu.memory_space<vmem>>, vector<1x16x128xf32>
    %2 = vector.shape_cast %1 : vector<1x16x128xf32> to vector<16x128xf32>
    %cst = arith.constant dense<0.000000e+00> : vector<8x128xf32>
    %3 = tpu.matmul %0, %2, %cst {dimension_numbers = #tpu.dot_dimension_numbers<[1], [0], [0], [1], [0, 0, 1, 1], [], []>} : vector<8x16xf32>, vector<16x128xf32>, vector<8x128xf32> -> vector<8x128xf32>
    %c0_4 = arith.constant 0 : index
    %c0_5 = arith.constant 0 : index
    %c0_6 = arith.constant 0 : index
    %4 = vector.load %arg4[%c0_4, %c0_5, %c0_6] : memref<2x1x128xf32, #tpu.memory_space<vmem>>, vector<1x1x128xf32>
    %5 = vector.shape_cast %4 : vector<1x1x128xf32> to vector<1x128xf32>
    %6 = vector.broadcast %5 : vector<1x128xf32> to vector<8x128xf32>
    %7 = arith.addf %3, %6 : vector<8x128xf32>
    %c1 = arith.constant 1 : index
    %c0_7 = arith.constant 0 : index
    %c0_8 = arith.constant 0 : index
    %8 = vector.load %arg3[%c1, %c0_7, %c0_8] : memref<2x16x128xf32, #tpu.memory_space<vmem>>, vector<1x16x128xf32>
    %9 = vector.shape_cast %8 : vector<1x16x128xf32> to vector<16x128xf32>
    %cst_9 = arith.constant dense<0.000000e+00> : vector<8x128xf32>
    %10 = tpu.matmul %0, %9, %cst_9 {dimension_numbers = #tpu.dot_dimension_numbers<[1], [0], [0], [1], [0, 0, 1, 1], [], []>} : vector<8x16xf32>, vector<16x128xf32>, vector<8x128xf32> -> vector<8x128xf32>
    %c1_10 = arith.constant 1 : index
    %c0_11 = arith.constant 0 : index
    %c0_12 = arith.constant 0 : index
    %11 = vector.load %arg4[%c1_10, %c0_11, %c0_12] : memref<2x1x128xf32, #tpu.memory_space<vmem>>, vector<1x1x128xf32>
    %12 = vector.shape_cast %11 : vector<1x1x128xf32> to vector<1x128xf32>
    %13 = vector.broadcast %12 : vector<1x128xf32> to vector<8x128xf32>
    %14 = arith.addf %10, %13 : vector<8x128xf32>
    %cst_13 = arith.constant 0.000000e+00 : f32
    %15 = vector.broadcast %cst_13 : f32 to vector<8x128xf32>
    %16 = arith.cmpf ogt, %7, %15 : vector<8x128xf32>
    %cst_14 = arith.constant 1.000000e+00 : f32
    %17 = vector.broadcast %cst_14 : f32 to vector<8x128xf32>
    %18 = arith.addf %7, %17 : vector<8x128xf32>
    %19 = math.exp %7 : vector<8x128xf32>
    %20 = arith.select %16, %18, %19 : vector<8x128xi1>, vector<8x128xf32>
    %cst_15 = arith.constant 0.000000e+00 : f32
    %21 = vector.broadcast %cst_15 : f32 to vector<8x128xf32>
    %22 = arith.cmpf ogt, %14, %21 : vector<8x128xf32>
    %cst_16 = arith.constant 1.000000e+00 : f32
    %23 = vector.broadcast %cst_16 : f32 to vector<8x128xf32>
    %24 = arith.addf %14, %23 : vector<8x128xf32>
    %25 = math.exp %14 : vector<8x128xf32>
    %26 = arith.select %22, %24, %25 : vector<8x128xi1>, vector<8x128xf32>
    %27 = arith.mulf %20, %26 : vector<8x128xf32>
    %cst_17 = arith.constant 1.000000e+00 : f32
    %28 = vector.broadcast %cst_17 : f32 to vector<8x128xf32>
    %29 = arith.subf %27, %28 : vector<8x128xf32>
    %c0_18 = arith.constant 0 : index
    %c0_19 = arith.constant 0 : index
    %30 = vector.load %arg5[%c0_18, %c0_19] : memref<8x128xf32, #tpu.memory_space<vmem>>, vector<8x128xf32>
    tpu.vector_store %arg5[%c0_18, %c0_19], %29 {strides = array<i32>} : memref<8x128xf32, #tpu.memory_space<vmem>>, vector<8x128xf32>,
    return
  }
  func.func @transform_0(%arg0: i32, %arg1: i32) -> (i32, i32) {
    %c0_i32 = arith.constant 0 : i32
    %c0_i32_0 = arith.constant 0 : i32
    return %arg1, %c0_i32 : i32, i32
  }
  func.func @transform_1(%arg0: i32, %arg1: i32) -> (i32, i32, i32) {
    %c0_i32 = arith.constant 0 : i32
    %c0_i32_0 = arith.constant 0 : i32
    %c0_i32_1 = arith.constant 0 : i32
    return %c0_i32, %c0_i32_0, %arg0 : i32, i32, i32
  }
  func.func @transform_2(%arg0: i32, %arg1: i32) -> (i32, i32, i32) {
    %c0_i32 = arith.constant 0 : i32
    %c0_i32_0 = arith.constant 0 : i32
    %c0_i32_1 = arith.constant 0 : i32
    return %c0_i32, %c0_i32_0, %arg0 : i32, i32, i32
  }
  func.func @transform_3(%arg0: i32, %arg1: i32) -> (i32, i32) {
    %c0_i32 = arith.constant 0 : i32
    return %arg1, %arg0 : i32, i32
  }
}

</mosaic_0001>

<llo_original>
// kernel: onenet_forward.1
$region0: #{onenet_forward.1}
  #allocation0 [shape = 'u32[]', space=smem, size = 0x4, offset = 0x4, fixed_abs, tag = 'smem constant byte address 0x4 - core index']
  #allocation1 [shape = 'u32[72,128]{1,0:T(1,128)}', space=vmem, size = 0x9000, scoped, tag = 'internal scratch']
  %s0 = inlined_call_operand.hbm [shape: f32[8,16], index: 0, kind: input, shape index: {}]
  %s1 = inlined_call_operand.hbm [shape: f32[2,16,128], index: 1, kind: input, shape index: {}]
  %s2 = inlined_call_operand.hbm [shape: f32[2,1,128], index: 2, kind: input, shape index: {}]
  %s3 = inlined_call_operand.hbm [shape: f32[8,128], index: 3, kind: output, shape index: {}]
  %s4 = sld [smem:[#allocation0]]
  $region34: #{onenet_forward.1} parent=0
    _
  %s6 = ssub.s32 1, %s4
  %s7 = scalar_select 0, %s6, %s4
  $region1: #{onenet_forward.1} parent=0
    #allocation2 [shape = 'u8[4096]{0}', space=vmem, size = 0x1000, scoped, tag = 'input window, operand 0, single buffered']
    #allocation3 [shape = 's32[1]{0}', space=sflag, size = 0x4, scoped, tag = 'scoped memory for onenet_forward.1']
    #allocation4 [shape = 's32[1]{0}', space=sflag, size = 0x4, scoped, tag = 'scoped memory for onenet_forward.1']
    #allocation5 [shape = 'u8[16384]{0}', space=vmem, size = 0x4000, scoped, tag = 'input window, operand 1, single buffered']
    #allocation6 [shape = 's32[1]{0}', space=sflag, size = 0x4, scoped, tag = 'scoped memory for onenet_forward.1']
    #allocation7 [shape = 'u8[1024]{0}', space=vmem, size = 0x400, scoped, tag = 'input window, operand 2, single buffered']
    #allocation8 [shape = 'u8[4096]{0}', space=vmem, size = 0x1000, scoped, tag = 'output window, operand 0, single buffered']
    %8 = vsyncpa [#allocation3], 0
    %9 = vsyncpa [#allocation6], 0
    %10 = vsyncpa [#allocation4], 0
    // Predicated region
    $region2: #{onenet_forward.1} parent=1 // pred_check
      _
    $region3: #{onenet_forward.1} parent=1 // pred_check_branch
      %12 = sbr.rel (0) target = $region5
    $region4: #{onenet_forward.1} parent=1 // pred_region
      %14 = vsyncadd [#allocation3], 0
      %s16 = sshll.u32 %s0, 4
      %s17 = int_to_ptr.hbm [resolvable:$true] %s16
      %s18 = sshll.u32 [#allocation2], 4
      %s19 = int_to_ptr.vmem [resolvable:$true] %s18
      %21 = dma.hbm_to_vmem [thread:$0]  %s17, 128, %s19, [#allocation3]
    $region5: #{onenet_forward.1} parent=1 // pred_fallthru
      _
    // Predicated region
    $region6: #{onenet_forward.1} parent=1 // pred_check
      _
    $region7: #{onenet_forward.1} parent=1 // pred_check_branch
      %23 = sbr.rel (0) target = $region9
    $region8: #{onenet_forward.1} parent=1 // pred_region
      %25 = vsyncadd [#allocation6], 0
      %s26 = sshll.u32 %s1, 4
      %s27 = int_to_ptr.hbm [resolvable:$true] %s26
      %s28 = sshll.u32 [#allocation5], 4
      %s29 = int_to_ptr.vmem [resolvable:$true] %s28
      %34 = dma.hbm_to_vmem [thread:$0]  %s27, 512, %s29, [#allocation6], 128, 128, 8
    $region9: #{onenet_forward.1} parent=1 // pred_fallthru
      _
    // Predicated region
    $region10: #{onenet_forward.1} parent=1 // pred_check
      _
    $region11: #{onenet_forward.1} parent=1 // pred_check_branch
      %36 = sbr.rel (0) target = $region13
    $region12: #{onenet_forward.1} parent=1 // pred_region
      %38 = vsyncadd [#allocation6], 0
      %s39 = sshll.u32 %s2, 4
      %s40 = int_to_ptr.hbm [resolvable:$true] %s39
      %s41 = sshll.u32 [#allocation7], 4
      %s42 = int_to_ptr.vmem [resolvable:$true] %s41
      %47 = dma.hbm_to_vmem [thread:$0]  %s40, 32, %s42, [#allocation6], 16, 16, 1
    $region13: #{onenet_forward.1} parent=1 // pred_fallthru
      _
    // Predicated region
    $region14: #{onenet_forward.1} parent=1 // pred_check
      _
    $region15: #{onenet_forward.1} parent=1 // pred_check_branch
      %49 = sbr.rel (0) target = $region17
    $region16: #{onenet_forward.1} parent=1 // pred_region
      %51 = dma.done [#allocation3], 128
    $region17: #{onenet_forward.1} parent=1 // pred_fallthru
      _
    // Predicated region
    $region18: #{onenet_forward.1} parent=1 // pred_check
      _
    $region19: #{onenet_forward.1} parent=1 // pred_check_branch
      %53 = sbr.rel (0) target = $region21
    $region20: #{onenet_forward.1} parent=1 // pred_region
      %55 = dma.done [#allocation6], 512
    $region21: #{onenet_forward.1} parent=1 // pred_fallthru
      _
    // Predicated region
    $region22: #{onenet_forward.1} parent=1 // pred_check
      _
    $region23: #{onenet_forward.1} parent=1 // pred_check_branch
      %57 = sbr.rel (0) target = $region25
    $region24: #{onenet_forward.1} parent=1 // pred_region
      %59 = dma.done [#allocation6], 32
    $region25: #{onenet_forward.1} parent=1 // pred_fallthru
      _
    %v60 = vld [vmem:[#allocation2] sm:$0xff]
    %v61 = vld [vmem:[#allocation5] sm:$0xff]
    %v62 = vld [vmem:[#allocation5 + $0x8] sm:$0xff]
    %v63 = vld [vmem:[#allocation7] sm:$0x1]
    %v65 = vperm.slane %v63, 0
    %vm67 = vcmask 130048
    %v69 = vsel %vm67, %v60, 0
    %71 = vmatpush.msra.mxu0 0.0
    %72 = vmatpush.msra.mxu0 0.0
    %73 = vmatpush.msra.mxu0 0.0
    %74 = vmatpush.msra.mxu0 0.0
    %75 = vmatpush.msra.mxu0 0.0
    %76 = vmatpush.msra.mxu0 0.0
    %77 = vmatpush.msra.mxu0 0.0
    %78 = vmatpush.msra.mxu0 0.0
    %79 = vmatpush.msra.mxu0 0.0
    %80 = vmatpush.msra.mxu0 0.0
    %81 = vmatpush.msra.mxu0 0.0
    %82 = vmatpush.msra.mxu0 0.0
    %83 = vmatpush.msra.mxu0 0.0
    %84 = vmatpush.msra.mxu0 0.0
    %85 = vmatpush.msra.mxu0 %v62
    %86 = vmatpush.msra.mxu0 %v61
    %87 = vmatmul.f32.gmra.mxu0 %v69
    %v88 = vpop.f32.mrf.mxu0
    %v89 = vadd.f32 %v65, %v88
    %90 = vdwg.mxu0
    %s91 = scalar_lea.vmem [#allocation5], 16
    %v92 = vld [vmem:[%s91] sm:$0xff]
    %v93 = vld [vmem:[%s91 + $0x8] sm:$0xff]
    %s94 = scalar_lea.vmem [#allocation7], 1
    %v95 = vld [vmem:[%s94] sm:$0x1]
    %v97 = vperm.slane %v95, 0
    %99 = vmatpush.msra.mxu0 0.0
    %100 = vmatpush.msra.mxu0 0.0
    %101 = vmatpush.msra.mxu0 0.0
    %102 = vmatpush.msra.mxu0 0.0
    %103 = vmatpush.msra.mxu0 0.0
    %104 = vmatpush.msra.mxu0 0.0
    %105 = vmatpush.msra.mxu0 0.0
    %106 = vmatpush.msra.mxu0 0.0
    %107 = vmatpush.msra.mxu0 0.0
    %108 = vmatpush.msra.mxu0 0.0
    %109 = vmatpush.msra.mxu0 0.0
    %110 = vmatpush.msra.mxu0 0.0
    %111 = vmatpush.msra.mxu0 0.0
    %112 = vmatpush.msra.mxu0 0.0
    %113 = vmatpush.msra.mxu0 %v93
    %114 = vmatpush.msra.mxu0 %v92
    %115 = vmatmul.f32.gmra.mxu0 %v69
    %v116 = vpop.f32.mrf.mxu0
    %v117 = vadd.f32 %v97, %v116
    %118 = vdwg.mxu0
    %vm119 = vcmp.gt.f32.partialorder %v89, 0.0
    %v120 = vadd.f32 %v89, 1.0
    %v121 = vmul.f32 %v89, 1.442695
    %v122 = vpow.pop %v121
    %v123 = vsel %vm119, %v120, %v122
    %vm124 = vcmp.gt.f32.partialorder %v117, 0.0
    %v125 = vadd.f32 %v117, 1.0
    %v126 = vmul.f32 %v117, 1.442695
    %v127 = vpow.pop %v126
    %v128 = vsel %vm124, %v125, %v127
    %v129 = vmul.f32 %v123, %v128
    %v130 = vsub.f32 %v129, 1.0
    %131 = vst [vmem:[#allocation8] sm:$0xff] %v130
    // Predicated region
    $region26: #{onenet_forward.1} parent=1 // pred_check
      _
    $region27: #{onenet_forward.1} parent=1 // pred_check_branch
      %133 = sbr.rel (0) target = $region29
    $region28: #{onenet_forward.1} parent=1 // pred_region
      %135 = vsyncadd [#allocation4], 0
      %s137 = sshll.u32 [#allocation8], 4
      %s138 = int_to_ptr.vmem [resolvable:$true] %s137
      %s139 = sshll.u32 %s3, 4
      %s140 = int_to_ptr.hbm [resolvable:$true] %s139
      %142 = dma.vmem_to_hbm [thread:$0]  %s138, 128, %s140, [#allocation4]
    $region29: #{onenet_forward.1} parent=1 // pred_fallthru
      _
    // Predicated region
    $region30: #{onenet_forward.1} parent=1 // pred_check
      _
    $region31: #{onenet_forward.1} parent=1 // pred_check_branch
      %144 = sbr.rel (0) target = $region33
    $region32: #{onenet_forward.1} parent=1 // pred_region
      %146 = dma.done [#allocation4], 128
    $region33: #{onenet_forward.1} parent=1 // pred_fallthru
      _
    %147 = vsyncpa [#allocation3], 1
    %148 = vsyncpa [#allocation6], 1
    %149 = vsyncpa [#allocation4], 1

</llo_original>
